<compile_context>
chip_gen: v5e
topology: v5e:2x2
jax: 0.10.0
libtpu: 0.0.40
codegen_flags: <defaults>
</compile_context>

<pallas_src>
import jax
import jax.numpy as jnp
from jax.experimental import pallas as pl
from jax.experimental.pallas import tpu as pltpu


def _linear_kernel(x_ref, w_ref, b_ref, out_ref):
    # Single-tile matmul on the MXU with f32 accumulation; bias add on the VPU.
    acc = jnp.dot(x_ref[...], w_ref[...], preferred_element_type=jnp.float32)
    out_ref[...] = (acc + b_ref[...]).astype(out_ref.dtype)


def init_test_decoder_params(w, b):
    """One-time parameter prep (hoisted out of the per-call hot path).

    w : [output_dim, input_dim]  (PyTorch nn.Linear layout)
    b : [output_dim]
    returns (w_t, b_row) in kernel-ready layout:
        w_t   : [input_dim, output_dim]
        b_row : [1, output_dim]
    """
    w_t = jnp.transpose(w)           # [Din, Dout]
    b_row = b.reshape(1, -1)         # [1, Dout]
    return w_t, b_row


def test_decoder_forward(x, w_t, b_row):
    """Forward pass of TestDecoder.

    x     : [B, input_dim]            float32
    w_t   : [input_dim, output_dim]   (kernel-ready, pre-transposed)
    b_row : [1, output_dim]           (kernel-ready)
    returns (out, out) with out : [B, output_dim]
    """
    B, Din = x.shape
    Dout = w_t.shape[1]

    cost = pl.CostEstimate(
        flops=2 * B * Din * Dout,
        bytes_accessed=4 * (B * Din + Din * Dout + Dout + B * Dout),
        transcendentals=0,
    )

    # Gridless pallas_call: one invocation, all operands resident in VMEM.
    # If B or Dout ever grow into the multi-MiB range, reintroduce a grid over
    # B (tiles >= 512 rows) and re-derive the VMEM budget per generation
    # (v7x has 64 MiB physical / 32 MiB default-scoped vs 128 MiB on v5e/v6e).
    out = pl.pallas_call(
        _linear_kernel,
        out_shape=jax.ShapeDtypeStruct((B, Dout), x.dtype),
        in_specs=[
            pl.BlockSpec(memory_space=pltpu.MemorySpace.VMEM),
            pl.BlockSpec(memory_space=pltpu.MemorySpace.VMEM),
            pl.BlockSpec(memory_space=pltpu.MemorySpace.VMEM),
        ],
        out_specs=pl.BlockSpec(memory_space=pltpu.MemorySpace.VMEM),
        cost_estimate=cost,
    )(x, w_t, b_row)

    # TestDecoder.forward returns the same tensor twice (zero-cost aliases).
    return out, out


if __name__ == "__main__":
    # Module hyperparameters (hidden_dim is unused by TestDecoder.forward).
    input_dim, hidden_dim, output_dim = 32, 64, 16
    batch = 8

    key = jax.random.PRNGKey(0)
    k_x, k_w, k_b = jax.random.split(key, 3)

    # PyTorch weight is [output_dim, input_dim]; prep kernel-ready layout ONCE.
    w = jax.random.normal(k_w, (output_dim, input_dim), dtype=jnp.float32) * 0.1
    b = jax.random.normal(k_b, (output_dim,), dtype=jnp.float32) * 0.1
    w_t, b_row = init_test_decoder_params(w, b)

    x = jax.random.normal(k_x, (batch, input_dim), dtype=jnp.float32)

    fwd = jax.jit(test_decoder_forward)
    out1, out2 = fwd(x, w_t, b_row)
    jax.block_until_ready(out1)
    jax.block_until_ready(out2)

    # Sanity check against plain JAX reference.
    ref = x @ w_t + b[None, :]
    assert out1.shape == (batch, output_dim)
    assert jnp.allclose(out1, ref, atol=1e-5, rtol=1e-5)
    assert jnp.allclose(out2, ref, atol=1e-5, rtol=1e-5)

    print("KERNEL_OK")
</pallas_src>

<mosaic_0001>
module attributes {stable_mosaic.version = 11 : i64} {
  func.func @_linear_kernel(%arg0: memref<8x32xf32, #tpu.memory_space<vmem>>, %arg1: memref<32x16xf32, #tpu.memory_space<vmem>>, %arg2: memref<1x16xf32, #tpu.memory_space<vmem>>, %arg3: memref<8x16xf32, #tpu.memory_space<vmem>>) attributes {dimension_semantics = [], scalar_prefetch = 0 : i64, scratch_operands = 0 : i64, tpu.core_type = #tpu.core_type<tc>} {
    %c0 = arith.constant 0 : index
    %c0_0 = arith.constant 0 : index
    %0 = vector.load %arg0[%c0, %c0_0] : memref<8x32xf32, #tpu.memory_space<vmem>>, vector<8x32xf32>
    %c0_1 = arith.constant 0 : index
    %c0_2 = arith.constant 0 : index
    %1 = vector.load %arg1[%c0_1, %c0_2] : memref<32x16xf32, #tpu.memory_space<vmem>>, vector<32x16xf32>
    %cst = arith.constant dense<0.000000e+00> : vector<8x16xf32>
    %2 = tpu.matmul %0, %1, %cst {dimension_numbers = #tpu.dot_dimension_numbers<[1], [0], [0], [1], [0, 0, 1, 1], [], []>} : vector<8x32xf32>, vector<32x16xf32>, vector<8x16xf32> -> vector<8x16xf32>
    %c0_3 = arith.constant 0 : index
    %c0_4 = arith.constant 0 : index
    %3 = vector.load %arg2[%c0_3, %c0_4] : memref<1x16xf32, #tpu.memory_space<vmem>>, vector<1x16xf32>
    %4 = vector.broadcast %3 : vector<1x16xf32> to vector<8x16xf32>
    %5 = arith.addf %2, %4 : vector<8x16xf32>
    %c0_5 = arith.constant 0 : index
    %c0_6 = arith.constant 0 : index
    %6 = vector.load %arg3[%c0_5, %c0_6] : memref<8x16xf32, #tpu.memory_space<vmem>>, vector<8x16xf32>
    tpu.vector_store %arg3[%c0_5, %c0_6], %5 {strides = array<i32>} : memref<8x16xf32, #tpu.memory_space<vmem>>, vector<8x16xf32>,
    return
  }
}

</mosaic_0001>

<llo_original>
// kernel: test_decoder_forward.1
$region0: #{test_decoder_forward.1}
  #allocation0 [shape = 'u32[]', space=smem, size = 0x4, offset = 0x4, fixed_abs, tag = 'smem constant byte address 0x4 - core index']
  #allocation1 [shape = 'u32[72,128]{1,0:T(1,128)}', space=vmem, size = 0x9000, scoped, tag = 'internal scratch']
  %s0 = inlined_call_operand.vmem [shape: f32[8,32], index: 0, kind: input, shape index: {}]
  %s1 = inlined_call_operand.vmem [shape: f32[32,16], index: 1, kind: input, shape index: {}]
  %s2 = inlined_call_operand.vmem [shape: f32[1,16], index: 2, kind: input, shape index: {}]
  %s3 = inlined_call_operand.vmem [shape: f32[8,16], index: 3, kind: output, shape index: {}]
  %s4 = sld [smem:[#allocation0]]
  $region22: #{test_decoder_forward.1} parent=0
    _
  %s6 = ssub.s32 1, %s4
  %s7 = scalar_select 0, %s6, %s4
  // Predicated region
  $region2: #{test_decoder_forward.1} parent=0 // pred_check
    _
  $region3: #{test_decoder_forward.1} parent=0 // pred_check_branch
    %9 = sbr.rel (0) target = $region5
  $region4: #{test_decoder_forward.1} parent=0 // pred_region
    _
  $region5: #{test_decoder_forward.1} parent=0 // pred_fallthru
    _
  // Predicated region
  $region6: #{test_decoder_forward.1} parent=0 // pred_check
    _
  $region7: #{test_decoder_forward.1} parent=0 // pred_check_branch
    %11 = sbr.rel (0) target = $region9
  $region8: #{test_decoder_forward.1} parent=0 // pred_region
    _
  $region9: #{test_decoder_forward.1} parent=0 // pred_fallthru
    _
  // Predicated region
  $region10: #{test_decoder_forward.1} parent=0 // pred_check
    _
  $region11: #{test_decoder_forward.1} parent=0 // pred_check_branch
    %13 = sbr.rel (0) target = $region13
  $region12: #{test_decoder_forward.1} parent=0 // pred_region
    _
  $region13: #{test_decoder_forward.1} parent=0 // pred_fallthru
    _
  %v14 = vld [vmem:[%s0] sm:$0xff]
  %v15 = vld [vmem:[%s1] sm:$0xff]
  %v16 = vld [vmem:[%s1 + $0x8] sm:$0xff]
  %v17 = vld [vmem:[%s1 + $0x10] sm:$0xff]
  %v18 = vld [vmem:[%s1 + $0x18] sm:$0xff]
  %v19 = vld [vmem:[%s2] sm:$0x1]
  %v21 = vperm.slane %v19, 0
  %vm23 = vcmask 261120
  %v25 = vsel %vm23, %v14, 0
  %27 = vmatpush.msra.mxu0 0.0
  %28 = vmatpush.msra.mxu0 0.0
  %29 = vmatpush.msra.mxu0 0.0
  %30 = vmatpush.msra.mxu0 0.0
  %31 = vmatpush.msra.mxu0 0.0
  %32 = vmatpush.msra.mxu0 0.0
  %33 = vmatpush.msra.mxu0 0.0
  %34 = vmatpush.msra.mxu0 0.0
  %35 = vmatpush.msra.mxu0 0.0
  %36 = vmatpush.msra.mxu0 0.0
  %37 = vmatpush.msra.mxu0 0.0
  %38 = vmatpush.msra.mxu0 0.0
  %39 = vmatpush.msra.mxu0 %v18
  %40 = vmatpush.msra.mxu0 %v17
  %41 = vmatpush.msra.mxu0 %v16
  %42 = vmatpush.msra.mxu0 %v15
  %43 = vmatmul.f32.gmra.mxu0 %v25
  %v44 = vpop.f32.mrf.mxu0
  %v45 = vadd.f32 %v21, %v44
  %46 = vdwg.mxu0
  %vm47 = vcmask 130048
  %48 = vst.msk [vmem:[%s3] sm:$0xff] %vm47, %v45
  // Predicated region
  $region14: #{test_decoder_forward.1} parent=0 // pred_check
    _
  $region15: #{test_decoder_forward.1} parent=0 // pred_check_branch
    %50 = sbr.rel (0) target = $region17
  $region16: #{test_decoder_forward.1} parent=0 // pred_region
    _
  $region17: #{test_decoder_forward.1} parent=0 // pred_fallthru
    _
  // Predicated region
  $region18: #{test_decoder_forward.1} parent=0 // pred_check
    _
  $region19: #{test_decoder_forward.1} parent=0 // pred_check_branch
    %52 = sbr.rel (0) target = $region21
  $region20: #{test_decoder_forward.1} parent=0 // pred_region
    _
  $region21: #{test_decoder_forward.1} parent=0 // pred_fallthru
    _

</llo_original>
